<compile_context>
chip_gen: v5e
topology: v5e:2x2
jax: 0.10.0
libtpu: 0.0.40
codegen_flags: <defaults>
</compile_context>

<pallas_src>
import numpy as np
import jax
import jax.numpy as jnp
from jax.experimental import pallas as pl
from jax.experimental.pallas import tpu as pltpu

# ----------------------------- hyperparameters ------------------------------
DIM_NODE_SIGNALS = [4, 8]     # F (node-signal dimensions per layer)
N_FILTER_TAPS = [3]           # K (filter taps of the single graph-filter layer)
DIM_LAYERS_MLP = [32, 10]     # readout MLP
NUM_NODES = 16                # N (GSO is N x N, dimEdgeFeatures E = 1)

F0, F1 = DIM_NODE_SIGNALS
KC = N_FILTER_TAPS[0]
D0, D1 = DIM_LAYERS_MLP
N = NUM_NODES
D1_PAD = 128                  # lane-dense padded output width (>= D1)

# example data sizes
B, T = 2, 8


# ------------------------------ Pallas kernel -------------------------------
def _selection_gnn_t_kernel(x_ref, wfold_ref, bg_ref, w1t_ref, b1_ref,
                            w2t_ref, b2_ref, o_ref):
    # x_ref     : (TM, F0*N)   bf16 activations, lanes = (feature, node), node fastest
    # wfold_ref : (F0*N, F1*N) bf16 folded graph filter  sum_k kron(W_taps[k], S^k)
    # bg_ref    : (1, F1*N)    f32 graph-filter bias, tiled over nodes
    # w1t_ref   : (F1*N, D0) bf16,  b1_ref: (1, D0) f32
    # w2t_ref   : (D0, D1_PAD) bf16 (zero-padded past D1), b2_ref: (1, D1_PAD) f32
    # o_ref     : (TM, D1_PAD) f32
    x = x_ref[...]

    # --- graph filter (fully folded): y = relu(x @ Wfold + bg) -> MLP flat layout ---
    y = jnp.dot(x, wfold_ref[...], preferred_element_type=jnp.float32)
    y = jnp.maximum(y + bg_ref[...], 0.0).astype(x.dtype)        # (TM, F1*N)

    # --- readout MLP: Linear(F1*N -> D0) + ReLU + Linear(D0 -> D1_PAD) ---
    h = jnp.dot(y, w1t_ref[...], preferred_element_type=jnp.float32) + b1_ref[...]
    h = jnp.maximum(h, 0.0).astype(x.dtype)
    o_ref[...] = jnp.dot(h, w2t_ref[...],
                         preferred_element_type=jnp.float32) + b2_ref[...]


# ------------------------- one-time parameter folding ------------------------
def fold_params(params, S, compute_dtype=jnp.bfloat16):
    """Fold GSO + weights once per parameter set (NOT in the per-call hot path)."""
    S = jnp.asarray(S, jnp.float32)
    Sk = jnp.eye(N, dtype=jnp.float32)                    # S^0
    wfold = jnp.zeros((F0 * N, F1 * N), jnp.float32)
    for k in range(KC):
        wk = params["wg"][:, k, :].T                      # (F0, F1), [f,g] = h[g,k,f]
        wfold = wfold + jnp.kron(wk, Sk)                  # block (f,g) carries S^k
        Sk = Sk @ S
    w2t_pad = jnp.zeros((D0, D1_PAD), jnp.float32).at[:, :D1].set(params["w2"].T)
    b2_pad = jnp.zeros((1, D1_PAD), jnp.float32).at[:, :D1].set(params["b2"])
    folded = dict(
        wfold=wfold.astype(compute_dtype),                               # (F0*N, F1*N)
        bg=jnp.repeat(params["bg"], N)[None, :].astype(jnp.float32),     # (1, F1*N)
        w1t=params["w1"].T.astype(compute_dtype),                        # (F1*N, D0)
        b1=params["b1"][None, :].astype(jnp.float32),                    # (1, D0)
        w2t=w2t_pad.astype(compute_dtype),                               # (D0, D1_PAD)
        b2=b2_pad,                                                       # (1, D1_PAD)
    )
    return jax.tree_util.tree_map(jax.block_until_ready, folded)


# --------------------------------- wrapper ----------------------------------
def _choose_tile_m(M):
    # bf16 sublane packing wants multiples of 16; keep >= 2 grid steps once M is
    # non-trivial (both v7x TensorCores), cap tiles at 256 rows.
    if M >= 512:
        return 256
    if M >= 32:
        return max(16, ((M // 2) // 16) * 16)
    return M                                  # tiny M: single full-extent block


@jax.jit
def selection_gnn_t_forward(x, folded):
    """x: [B, T, F0, N] f32. Returns [B, T, D1] f32."""
    B_, T_, F0_, N_ = x.shape
    assert F0_ == F0 and N_ == N
    FN0, FN1 = F0_ * N_, F1 * N_
    M = B_ * T_

    # flatten (B, T) into the matmul M dimension; lanes = (feature, node), node fastest
    x2 = x.reshape(M, FN0).astype(folded["wfold"].dtype)
    TM = _choose_tile_m(M)
    Mp = pl.cdiv(M, TM) * TM
    if Mp != M:
        x2 = jnp.pad(x2, ((0, Mp - M), (0, 0)))

    out = pl.pallas_call(
        _selection_gnn_t_kernel,
        out_shape=jax.ShapeDtypeStruct((Mp, D1_PAD), jnp.float32),
        grid=(Mp // TM,),
        in_specs=[
            pl.BlockSpec((TM, FN0), lambda m: (m, 0)),
            pl.BlockSpec((FN0, FN1), lambda m: (0, 0)),
            pl.BlockSpec((1, FN1), lambda m: (0, 0)),
            pl.BlockSpec((FN1, D0), lambda m: (0, 0)),
            pl.BlockSpec((1, D0), lambda m: (0, 0)),
            pl.BlockSpec((D0, D1_PAD), lambda m: (0, 0)),
            pl.BlockSpec((1, D1_PAD), lambda m: (0, 0)),
        ],
        out_specs=pl.BlockSpec((TM, D1_PAD), lambda m: (m, 0)),
        compiler_params=pltpu.CompilerParams(dimension_semantics=("parallel",)),
    )(x2, folded["wfold"], folded["bg"], folded["w1t"], folded["b1"],
      folded["w2t"], folded["b2"])

    return out[:M, :D1].reshape(B_, T_, D1)


# ----------------------------- params / reference ---------------------------
def init_params(key):
    ks = jax.random.split(key, 6)

    def u(k, shape, fan_in):
        bnd = 1.0 / float(np.sqrt(fan_in))
        return jax.random.uniform(k, shape, jnp.float32, -bnd, bnd)

    return dict(
        wg=u(ks[0], (F1, KC, F0), F0 * KC),    # graph-filter taps h[g, k, f] (E = 1)
        bg=u(ks[1], (F1,), F0 * KC),           # graph-filter bias (per output feature)
        w1=u(ks[2], (D0, F1 * N), F1 * N),     # Linear(F1*N -> D0)
        b1=u(ks[3], (D0,), F1 * N),
        w2=u(ks[4], (D1, D0), D0),             # Linear(D0 -> D1)
        b2=u(ks[5], (D1,), D0),
    )


def reference_forward(x, S, p):
    """Pure-JAX f32 mirror of the PyTorch SelectionGNN_t forward (E = 1)."""
    B_, T_, F0_, N_ = x.shape
    z = x
    taps = [z]
    for _ in range(1, KC):
        z = jnp.einsum("btfn,nm->btfm", z, S)
        taps.append(z)
    zst = jnp.stack(taps, axis=2)                                   # [B,T,K,F0,N]
    y = jnp.einsum("btkfn,gkf->btgn", zst, p["wg"]) + p["bg"][None, None, :, None]
    y = jnp.maximum(y, 0.0)
    flat = y.reshape(B_, T_, F1 * N_)                               # column = f*N + n
    h = jnp.maximum(flat @ p["w1"].T + p["b1"], 0.0)
    return h @ p["w2"].T + p["b2"]                                  # [B, T, D1]


# ----------------------------------- main ------------------------------------
if __name__ == "__main__":
    key = jax.random.PRNGKey(0)
    kx, ks_, kp = jax.random.split(key, 3)

    x = jax.random.normal(kx, (B, T, F0, N), jnp.float32)
    A_ = jax.random.uniform(ks_, (N, N), jnp.float32)
    S = (A_ + A_.T) / (2.0 * N)          # fixed symmetric GSO (E = 1), shared by all samples
    params = init_params(kp)

    folded = fold_params(params, S)      # one-time weight/GSO folding (off the hot path)

    y = selection_gnn_t_forward(x, folded)
    y = jax.block_until_ready(y)

    assert y.shape == (B, T, D1)
    y_ref = reference_forward(x, S, params)
    # bf16 operands (f32 accumulation) -> tolerance relaxed vs. pure-f32 version
    np.testing.assert_allclose(np.asarray(y), np.asarray(y_ref),
                               rtol=2e-2, atol=2e-2)
    print("KERNEL_OK")
</pallas_src>

<mosaic_0001>
module attributes {stable_mosaic.version = 11 : i64} {
  func.func @_selection_gnn_t_kernel(%arg0: i32, %arg1: memref<16x64xbf16, #tpu.memory_space<vmem>>, %arg2: memref<64x128xbf16, #tpu.memory_space<vmem>>, %arg3: memref<1x128xf32, #tpu.memory_space<vmem>>, %arg4: memref<128x32xbf16, #tpu.memory_space<vmem>>, %arg5: memref<1x32xf32, #tpu.memory_space<vmem>>, %arg6: memref<32x128xbf16, #tpu.memory_space<vmem>>, %arg7: memref<1x128xf32, #tpu.memory_space<vmem>>, %arg8: memref<16x128xf32, #tpu.memory_space<vmem>>) attributes {dimension_semantics = [#tpu.dimension_semantics<parallel>], iteration_bounds = array<i64: 1>, scalar_prefetch = 0 : i64, scratch_operands = 0 : i64, tpu.core_type = #tpu.core_type<tc>, window_params = [{transform_indices = @transform_0, window_bounds = array<i64: 16, 64>}, {pipeline_mode = #tpu.pipeline_mode<synchronous>, transform_indices = @transform_1, window_bounds = array<i64: 64, 128>}, {pipeline_mode = #tpu.pipeline_mode<synchronous>, transform_indices = @transform_2, window_bounds = array<i64: 1, 128>}, {pipeline_mode = #tpu.pipeline_mode<synchronous>, transform_indices = @transform_3, window_bounds = array<i64: 128, 32>}, {pipeline_mode = #tpu.pipeline_mode<synchronous>, transform_indices = @transform_4, window_bounds = array<i64: 1, 32>}, {pipeline_mode = #tpu.pipeline_mode<synchronous>, transform_indices = @transform_5, window_bounds = array<i64: 32, 128>}, {pipeline_mode = #tpu.pipeline_mode<synchronous>, transform_indices = @transform_6, window_bounds = array<i64: 1, 128>}, {transform_indices = @transform_7, window_bounds = array<i64: 16, 128>}]} {
    %c0 = arith.constant 0 : index
    %c0_0 = arith.constant 0 : index
    %0 = vector.load %arg1[%c0, %c0_0] : memref<16x64xbf16, #tpu.memory_space<vmem>>, vector<16x64xbf16>
    %c0_1 = arith.constant 0 : index
    %c0_2 = arith.constant 0 : index
    %1 = vector.load %arg2[%c0_1, %c0_2] : memref<64x128xbf16, #tpu.memory_space<vmem>>, vector<64x128xbf16>
    %cst = arith.constant dense<0.000000e+00> : vector<16x128xf32>
    %2 = tpu.matmul %0, %1, %cst {dimension_numbers = #tpu.dot_dimension_numbers<[1], [0], [0], [1], [0, 0, 1, 1], [], []>} : vector<16x64xbf16>, vector<64x128xbf16>, vector<16x128xf32> -> vector<16x128xf32>
    %c0_3 = arith.constant 0 : index
    %c0_4 = arith.constant 0 : index
    %3 = vector.load %arg3[%c0_3, %c0_4] : memref<1x128xf32, #tpu.memory_space<vmem>>, vector<1x128xf32>
    %4 = vector.broadcast %3 : vector<1x128xf32> to vector<16x128xf32>
    %5 = arith.addf %2, %4 : vector<16x128xf32>
    %cst_5 = arith.constant 0.000000e+00 : f32
    %6 = vector.broadcast %cst_5 : f32 to vector<16x128xf32>
    %7 = arith.maximumf %5, %6 : vector<16x128xf32>
    %8 = arith.truncf %7 : vector<16x128xf32> to vector<16x128xbf16>
    %c0_6 = arith.constant 0 : index
    %c0_7 = arith.constant 0 : index
    %9 = vector.load %arg4[%c0_6, %c0_7] : memref<128x32xbf16, #tpu.memory_space<vmem>>, vector<128x32xbf16>
    %cst_8 = arith.constant dense<0.000000e+00> : vector<16x32xf32>
    %10 = tpu.matmul %8, %9, %cst_8 {dimension_numbers = #tpu.dot_dimension_numbers<[1], [0], [0], [1], [0, 0, 1, 1], [], []>} : vector<16x128xbf16>, vector<128x32xbf16>, vector<16x32xf32> -> vector<16x32xf32>
    %c0_9 = arith.constant 0 : index
    %c0_10 = arith.constant 0 : index
    %11 = vector.load %arg5[%c0_9, %c0_10] : memref<1x32xf32, #tpu.memory_space<vmem>>, vector<1x32xf32>
    %12 = vector.broadcast %11 : vector<1x32xf32> to vector<16x32xf32>
    %13 = arith.addf %10, %12 : vector<16x32xf32>
    %cst_11 = arith.constant 0.000000e+00 : f32
    %14 = vector.broadcast %cst_11 : f32 to vector<16x32xf32>
    %15 = arith.maximumf %13, %14 : vector<16x32xf32>
    %16 = arith.truncf %15 : vector<16x32xf32> to vector<16x32xbf16>
    %c0_12 = arith.constant 0 : index
    %c0_13 = arith.constant 0 : index
    %17 = vector.load %arg6[%c0_12, %c0_13] : memref<32x128xbf16, #tpu.memory_space<vmem>>, vector<32x128xbf16>
    %cst_14 = arith.constant dense<0.000000e+00> : vector<16x128xf32>
    %18 = tpu.matmul %16, %17, %cst_14 {dimension_numbers = #tpu.dot_dimension_numbers<[1], [0], [0], [1], [0, 0, 1, 1], [], []>} : vector<16x32xbf16>, vector<32x128xbf16>, vector<16x128xf32> -> vector<16x128xf32>
    %c0_15 = arith.constant 0 : index
    %c0_16 = arith.constant 0 : index
    %19 = vector.load %arg7[%c0_15, %c0_16] : memref<1x128xf32, #tpu.memory_space<vmem>>, vector<1x128xf32>
    %20 = vector.broadcast %19 : vector<1x128xf32> to vector<16x128xf32>
    %21 = arith.addf %18, %20 : vector<16x128xf32>
    %c0_17 = arith.constant 0 : index
    %c0_18 = arith.constant 0 : index
    %22 = vector.load %arg8[%c0_17, %c0_18] : memref<16x128xf32, #tpu.memory_space<vmem>>, vector<16x128xf32>
    tpu.vector_store %arg8[%c0_17, %c0_18], %21 {strides = array<i32>} : memref<16x128xf32, #tpu.memory_space<vmem>>, vector<16x128xf32>,
    return
  }
  func.func @transform_0(%arg0: i32) -> (i32, i32) {
    %c0_i32 = arith.constant 0 : i32
    %c0_i32_0 = arith.constant 0 : i32
    return %arg0, %c0_i32 : i32, i32
  }
  func.func @transform_1(%arg0: i32) -> (i32, i32) {
    %c0_i32 = arith.constant 0 : i32
    %c0_i32_0 = arith.constant 0 : i32
    %c0_i32_1 = arith.constant 0 : i32
    return %c0_i32, %c0_i32_0 : i32, i32
  }
  func.func @transform_2(%arg0: i32) -> (i32, i32) {
    %c0_i32 = arith.constant 0 : i32
    %c0_i32_0 = arith.constant 0 : i32
    %c0_i32_1 = arith.constant 0 : i32
    return %c0_i32, %c0_i32_0 : i32, i32
  }
  func.func @transform_3(%arg0: i32) -> (i32, i32) {
    %c0_i32 = arith.constant 0 : i32
    %c0_i32_0 = arith.constant 0 : i32
    %c0_i32_1 = arith.constant 0 : i32
    return %c0_i32, %c0_i32_0 : i32, i32
  }
  func.func @transform_4(%arg0: i32) -> (i32, i32) {
    %c0_i32 = arith.constant 0 : i32
    %c0_i32_0 = arith.constant 0 : i32
    %c0_i32_1 = arith.constant 0 : i32
    return %c0_i32, %c0_i32_0 : i32, i32
  }
  func.func @transform_5(%arg0: i32) -> (i32, i32) {
    %c0_i32 = arith.constant 0 : i32
    %c0_i32_0 = arith.constant 0 : i32
    %c0_i32_1 = arith.constant 0 : i32
    return %c0_i32, %c0_i32_0 : i32, i32
  }
  func.func @transform_6(%arg0: i32) -> (i32, i32) {
    %c0_i32 = arith.constant 0 : i32
    %c0_i32_0 = arith.constant 0 : i32
    %c0_i32_1 = arith.constant 0 : i32
    return %c0_i32, %c0_i32_0 : i32, i32
  }
  func.func @transform_7(%arg0: i32) -> (i32, i32) {
    %c0_i32 = arith.constant 0 : i32
    %c0_i32_0 = arith.constant 0 : i32
    return %arg0, %c0_i32 : i32, i32
  }
}

</mosaic_0001>

<llo_original>
// kernel: selection_gnn_t_forward.1
$region0: #{selection_gnn_t_forward.1}
  #allocation0 [shape = 'u32[]', space=smem, size = 0x4, offset = 0x4, fixed_abs, tag = 'smem constant byte address 0x4 - core index']
  #allocation1 [shape = 'u32[72,128]{1,0:T(1,128)}', space=vmem, size = 0x9000, scoped, tag = 'internal scratch']
  %s0 = inlined_call_operand.vmem [shape: bf16[16,64], index: 0, kind: input, shape index: {}]
  %s1 = inlined_call_operand.vmem [shape: bf16[64,128], index: 1, kind: input, shape index: {}]
  %s2 = inlined_call_operand.vmem [shape: f32[1,128], index: 2, kind: input, shape index: {}]
  %s3 = inlined_call_operand.vmem [shape: bf16[128,32], index: 3, kind: input, shape index: {}]
  %s4 = inlined_call_operand.vmem [shape: f32[1,32], index: 4, kind: input, shape index: {}]
  %s5 = inlined_call_operand.vmem [shape: bf16[32,128], index: 5, kind: input, shape index: {}]
  %s6 = inlined_call_operand.vmem [shape: f32[1,128], index: 6, kind: input, shape index: {}]
  %s7 = inlined_call_operand.vmem [shape: f32[16,128], index: 7, kind: output, shape index: {}]
  %s8 = sld [smem:[#allocation0]]
  $region38: #{selection_gnn_t_forward.1} parent=0
    _
  %s10 = ssub.s32 1, %s8
  %s11 = scalar_select 0, %s10, %s8
  // Predicated region
  $region2: #{selection_gnn_t_forward.1} parent=0 // pred_check
    _
  $region3: #{selection_gnn_t_forward.1} parent=0 // pred_check_branch
    %13 = sbr.rel (0) target = $region5
  $region4: #{selection_gnn_t_forward.1} parent=0 // pred_region
    _
  $region5: #{selection_gnn_t_forward.1} parent=0 // pred_fallthru
    _
  // Predicated region
  $region6: #{selection_gnn_t_forward.1} parent=0 // pred_check
    _
  $region7: #{selection_gnn_t_forward.1} parent=0 // pred_check_branch
    %15 = sbr.rel (0) target = $region9
  $region8: #{selection_gnn_t_forward.1} parent=0 // pred_region
    _
  $region9: #{selection_gnn_t_forward.1} parent=0 // pred_fallthru
    _
  // Predicated region
  $region10: #{selection_gnn_t_forward.1} parent=0 // pred_check
    _
  $region11: #{selection_gnn_t_forward.1} parent=0 // pred_check_branch
    %17 = sbr.rel (0) target = $region13
  $region12: #{selection_gnn_t_forward.1} parent=0 // pred_region
    _
  $region13: #{selection_gnn_t_forward.1} parent=0 // pred_fallthru
    _
  // Predicated region
  $region14: #{selection_gnn_t_forward.1} parent=0 // pred_check
    _
  $region15: #{selection_gnn_t_forward.1} parent=0 // pred_check_branch
    %19 = sbr.rel (0) target = $region17
  $region16: #{selection_gnn_t_forward.1} parent=0 // pred_region
    _
  $region17: #{selection_gnn_t_forward.1} parent=0 // pred_fallthru
    _
  // Predicated region
  $region18: #{selection_gnn_t_forward.1} parent=0 // pred_check
    _
  $region19: #{selection_gnn_t_forward.1} parent=0 // pred_check_branch
    %21 = sbr.rel (0) target = $region21
  $region20: #{selection_gnn_t_forward.1} parent=0 // pred_region
    _
  $region21: #{selection_gnn_t_forward.1} parent=0 // pred_fallthru
    _
  // Predicated region
  $region22: #{selection_gnn_t_forward.1} parent=0 // pred_check
    _
  $region23: #{selection_gnn_t_forward.1} parent=0 // pred_check_branch
    %23 = sbr.rel (0) target = $region25
  $region24: #{selection_gnn_t_forward.1} parent=0 // pred_region
    _
  $region25: #{selection_gnn_t_forward.1} parent=0 // pred_fallthru
    _
  // Predicated region
  $region26: #{selection_gnn_t_forward.1} parent=0 // pred_check
    _
  $region27: #{selection_gnn_t_forward.1} parent=0 // pred_check_branch
    %25 = sbr.rel (0) target = $region29
  $region28: #{selection_gnn_t_forward.1} parent=0 // pred_region
    _
  $region29: #{selection_gnn_t_forward.1} parent=0 // pred_fallthru
    _
  %v27 = vld [vmem:[%s0] sm:$0xf]
  %v28 = vld [vmem:[%s0 + $0x4] sm:$0xf]
  %v29 = vld [vmem:[%s1] sm:$0xf]
  %v30 = vld [vmem:[%s1 + $0x4] sm:$0xf]
  %v31 = vld [vmem:[%s1 + $0x8] sm:$0xf]
  %v32 = vld [vmem:[%s1 + $0xc] sm:$0xf]
  %v33 = vld [vmem:[%s1 + $0x10] sm:$0xf]
  %v34 = vld [vmem:[%s1 + $0x14] sm:$0xf]
  %v35 = vld [vmem:[%s1 + $0x18] sm:$0xf]
  %v36 = vld [vmem:[%s1 + $0x1c] sm:$0xf]
  %v37 = vld [vmem:[%s2] sm:$0x1]
  %v39 = vperm.slane %v37, 0
  %v43 = vunpack.c.l.b16 %v27
  %v44 = vunpack.c.l.b16 %v28
  %v45 = vpack.c.b16 %v44, %v43
  %v54 = vunpack.c.l.b16 %v29
  %v55 = vunpack.c.l.b16 %v30
  %v56 = vunpack.c.l.b16 %v31
  %v57 = vunpack.c.l.b16 %v32
  %v58 = vunpack.c.l.b16 %v33
  %v59 = vunpack.c.l.b16 %v34
  %v60 = vunpack.c.l.b16 %v35
  %v61 = vunpack.c.l.b16 %v36
  %v62 = vpack.c.b16 %v55, %v54
  %v63 = vpack.c.b16 %v57, %v56
  %v64 = vpack.c.b16 %v59, %v58
  %v65 = vpack.c.b16 %v61, %v60
  %vm70 = vcmask 523264
  %v72 = vsel %vm70, %v45, 0
  %74 = vmatpush.bf16.msra.mxu0 0
  %75 = vmatpush.bf16.msra.mxu0 0
  %76 = vmatpush.bf16.msra.mxu0 0
  %77 = vmatpush.bf16.msra.mxu0 0
  %78 = vmatpush.bf16.msra.mxu0 %v65
  %79 = vmatpush.bf16.msra.mxu0 %v64
  %80 = vmatpush.bf16.msra.mxu0 %v63
  %81 = vmatpush.bf16.msra.mxu0 %v62
  %82 = vmatmul.bf16.gmra.mxu0 %v72
  %v83 = vpop.f32.mrf.mxu0
  %v84 = vadd.f32 %v39, %v83
  %v85 = vpop.f32.mrf.mxu0
  %v86 = vadd.f32 %v39, %v85
  %87 = vdwg.mxu0
  %v88 = vmax.f32 %v84, 0.0
  %v89 = vmax.f32 %v86, 0.0
  %v90 = vpack.c.bf16 %v89, %v88
  %v91 = vld [vmem:[%s3] sm:$0xf]
  %v92 = vld [vmem:[%s3 + $0x4] sm:$0xf]
  %v93 = vld [vmem:[%s3 + $0x8] sm:$0xf]
  %v94 = vld [vmem:[%s3 + $0xc] sm:$0xf]
  %v95 = vld [vmem:[%s3 + $0x10] sm:$0xf]
  %v96 = vld [vmem:[%s3 + $0x14] sm:$0xf]
  %v97 = vld [vmem:[%s3 + $0x18] sm:$0xf]
  %v98 = vld [vmem:[%s3 + $0x1c] sm:$0xf]
  %v99 = vld [vmem:[%s3 + $0x20] sm:$0xf]
  %v100 = vld [vmem:[%s3 + $0x24] sm:$0xf]
  %v101 = vld [vmem:[%s3 + $0x28] sm:$0xf]
  %v102 = vld [vmem:[%s3 + $0x2c] sm:$0xf]
  %v103 = vld [vmem:[%s3 + $0x30] sm:$0xf]
  %v104 = vld [vmem:[%s3 + $0x34] sm:$0xf]
  %v105 = vld [vmem:[%s3 + $0x38] sm:$0xf]
  %v106 = vld [vmem:[%s3 + $0x3c] sm:$0xf]
  %v107 = vld [vmem:[%s4] sm:$0x1]
  %v109 = vperm.slane %v107, 0
  %v127 = vunpack.c.l.b16 %v91
  %v128 = vunpack.c.l.b16 %v92
  %v129 = vunpack.c.l.b16 %v93
  %v130 = vunpack.c.l.b16 %v94
  %v131 = vunpack.c.l.b16 %v95
  %v132 = vunpack.c.l.b16 %v96
  %v133 = vunpack.c.l.b16 %v97
  %v134 = vunpack.c.l.b16 %v98
  %v135 = vunpack.c.l.b16 %v99
  %v136 = vunpack.c.l.b16 %v100
  %v137 = vunpack.c.l.b16 %v101
  %v138 = vunpack.c.l.b16 %v102
  %v139 = vunpack.c.l.b16 %v103
  %v140 = vunpack.c.l.b16 %v104
  %v141 = vunpack.c.l.b16 %v105
  %v142 = vunpack.c.l.b16 %v106
  %v143 = vpack.c.b16 %v128, %v127
  %v144 = vpack.c.b16 %v130, %v129
  %v145 = vpack.c.b16 %v132, %v131
  %v146 = vpack.c.b16 %v134, %v133
  %v147 = vpack.c.b16 %v136, %v135
  %v148 = vpack.c.b16 %v138, %v137
  %v149 = vpack.c.b16 %v140, %v139
  %v150 = vpack.c.b16 %v142, %v141
  %159 = vmatpush.bf16.msra.mxu0 %v150
  %160 = vmatpush.bf16.msra.mxu0 %v149
  %161 = vmatpush.bf16.msra.mxu0 %v148
  %162 = vmatpush.bf16.msra.mxu0 %v147
  %163 = vmatpush.bf16.msra.mxu0 %v146
  %164 = vmatpush.bf16.msra.mxu0 %v145
  %165 = vmatpush.bf16.msra.mxu0 %v144
  %166 = vmatpush.bf16.msra.mxu0 %v143
  %167 = vmatmul.bf16.gmra.mxu0 %v90
  %v168 = vpop.f32.mrf.mxu0
  %v169 = vadd.f32 %v109, %v168
  %v170 = vpop.f32.mrf.mxu0
  %v171 = vadd.f32 %v109, %v170
  %172 = vdwg.mxu0
  %v173 = vmax.f32 %v169, 0.0
  %v174 = vmax.f32 %v171, 0.0
  %v175 = vpack.c.bf16 %v174, %v173
  %v176 = vld [vmem:[%s5] sm:$0xf]
  %v177 = vld [vmem:[%s5 + $0x4] sm:$0xf]
  %v178 = vld [vmem:[%s5 + $0x8] sm:$0xf]
  %v179 = vld [vmem:[%s5 + $0xc] sm:$0xf]
  %v180 = vld [vmem:[%s6] sm:$0x1]
  %v182 = vperm.slane %v180, 0
  %v188 = vunpack.c.l.b16 %v176
  %v189 = vunpack.c.l.b16 %v177
  %v190 = vunpack.c.l.b16 %v178
  %v191 = vunpack.c.l.b16 %v179
  %v192 = vpack.c.b16 %v189, %v188
  %v193 = vpack.c.b16 %v191, %v190
  %vm196 = vcmask 261120
  %v198 = vsel %vm196, %v175, 0
  %200 = vmatpush.bf16.msra.mxu0 0
  %201 = vmatpush.bf16.msra.mxu0 0
  %202 = vmatpush.bf16.msra.mxu0 0
  %203 = vmatpush.bf16.msra.mxu0 0
  %204 = vmatpush.bf16.msra.mxu0 0
  %205 = vmatpush.bf16.msra.mxu0 0
  %206 = vmatpush.bf16.msra.mxu0 %v193
  %207 = vmatpush.bf16.msra.mxu0 %v192
  %208 = vmatmul.bf16.gmra.mxu0 %v198
  %v209 = vpop.f32.mrf.mxu0
  %v210 = vadd.f32 %v182, %v209
  %v211 = vpop.f32.mrf.mxu0
  %v212 = vadd.f32 %v182, %v211
  %213 = vdwg.mxu0
  %214 = vst [vmem:[%s7] sm:$0xff] %v210
  %215 = vst [vmem:[%s7 + $0x8] sm:$0xff] %v212
  // Predicated region
  $region30: #{selection_gnn_t_forward.1} parent=0 // pred_check
    _
  $region31: #{selection_gnn_t_forward.1} parent=0 // pred_check_branch
    %217 = sbr.rel (0) target = $region33
  $region32: #{selection_gnn_t_forward.1} parent=0 // pred_region
    _
  $region33: #{selection_gnn_t_forward.1} parent=0 // pred_fallthru
    _
  // Predicated region
  $region34: #{selection_gnn_t_forward.1} parent=0 // pred_check
    _
  $region35: #{selection_gnn_t_forward.1} parent=0 // pred_check_branch
    %219 = sbr.rel (0) target = $region37
  $region36: #{selection_gnn_t_forward.1} parent=0 // pred_region
    _
  $region37: #{selection_gnn_t_forward.1} parent=0 // pred_fallthru
    _

</llo_original>
